<compile_context>
chip_gen: v7x
topology: tpu7x:2x2x1
jax: 0.10.0
libtpu: 0.0.40
codegen_flags: <defaults>
</compile_context>

<pallas_src>
import functools
import math

import jax
import jax.numpy as jnp
from jax.experimental import pallas as pl
from jax.experimental.pallas import tpu as pltpu

LN_EPS = 1e-5                     # torch.nn.LayerNorm default eps
_INV_SQRT2 = 1.0 / math.sqrt(2.0)


def _round_up(a: int, b: int) -> int:
    return pl.cdiv(a, b) * b


def _pick_tm(n_rows: int, tm_max: int) -> int:
    """Token tile: large enough to amortize grid-step overhead, chosen to
    minimize tail padding for the actual token count (e.g. 576 -> 192)."""
    tm_max = max(16, _round_up(tm_max, 16))
    n16 = _round_up(max(n_rows, 1), 16)
    if n16 <= tm_max:
        return n16
    lo = max(16, (tm_max // 2) // 16 * 16)
    best, best_padded = tm_max, _round_up(n16, tm_max)
    for cand in range(tm_max, lo - 1, -16):
        padded = _round_up(n16, cand)
        if padded < best_padded:
            best, best_padded = cand, padded
    return best


def _default_vmem_limit(tm: int, cp: int, x_itemsize: int, w_itemsize: int,
                        single_buffer_params: bool) -> int:
    w_bufs = 1 if single_buffer_params else 2
    weights = 2 * cp * cp * w_itemsize * w_bufs      # w1 + w2 residency
    vectors = 4 * cp * 4 * w_bufs                    # gamma/beta/b1/b2 (f32)
    io_tiles = 2 * 2 * tm * cp * x_itemsize          # double-buffered x / out
    scratch = 4 * tm * cp * 4                        # f32 body temporaries
    need = int(1.25 * (weights + vectors + io_tiles + scratch))
    return min(max(need, 32 * 1024 * 1024), 100 * 1024 * 1024)


def _resblock_kernel(x_ref, gamma_ref, beta_ref, w1_ref, b1_ref, w2_ref,
                     b2_ref, o_ref, *, true_c, padded_c, inv_c, mxu_dtype):
    x = x_ref[...].astype(jnp.float32)                         # (tm, Cp)

    # --- LayerNorm: two-pass (centered) variance over the true channel count.
    # Padded lanes of x are zero, so the mean only needs 1/true_c scaling; for
    # the variance the centered values at padded lanes would be -mean, so mask
    # them out of the statistic (static branch: no cost when Cp == C).
    mean = jnp.sum(x, axis=-1, keepdims=True) * inv_c
    xc = x - mean
    if true_c != padded_c:
        lane = jax.lax.broadcasted_iota(jnp.int32, (1, padded_c), 1)
        xc_stat = jnp.where(lane < true_c, xc, 0.0)
    else:
        xc_stat = xc
    var = jnp.sum(xc_stat * xc_stat, axis=-1, keepdims=True) * inv_c
    xn = xc * jax.lax.rsqrt(var + LN_EPS)
    xn = xn * gamma_ref[...] + beta_ref[...]          # padded lanes -> exactly 0

    # --- proj: Linear -> GELU (exact erf, matches nn.GELU()) -> Linear.
    # MXU is fed mxu_dtype (default bf16) with f32 accumulation; the GELU
    # output is cast immediately so no extra (tm, Cp) f32 tensor stays live.
    h = jnp.dot(xn.astype(mxu_dtype), w1_ref[...],
                preferred_element_type=jnp.float32) + b1_ref[...]
    h = (0.5 * h * (1.0 + jax.lax.erf(h * _INV_SQRT2))).astype(mxu_dtype)
    y = jnp.dot(h, w2_ref[...],
                preferred_element_type=jnp.float32) + b2_ref[...]

    # --- residual on the *normed* input, per the PyTorch forward ---
    o_ref[...] = (xn + y).astype(o_ref.dtype)


def prepare_params(gamma, beta, w1, b1, w2, b2, *, mxu_dtype=jnp.bfloat16):
    """One-time padding + dtype cast of the parameters (hoisted out of the
    per-call path).  w1/w2 are stored (in, out), i.e. torch weight.T."""
    C = gamma.shape[-1]
    Cp = _round_up(C, 128)
    pc = Cp - C
    if pc:
        gamma = jnp.pad(gamma, (0, pc))
        beta = jnp.pad(beta, (0, pc))
        b1 = jnp.pad(b1, (0, pc))
        b2 = jnp.pad(b2, (0, pc))
        w1 = jnp.pad(w1, ((0, pc), (0, pc)))
        w2 = jnp.pad(w2, ((0, pc), (0, pc)))
    return dict(
        C=C, Cp=Cp, mxu_dtype=mxu_dtype,
        gamma=gamma.reshape(1, Cp).astype(jnp.float32),
        beta=beta.reshape(1, Cp).astype(jnp.float32),
        b1=b1.reshape(1, Cp).astype(jnp.float32),
        b2=b2.reshape(1, Cp).astype(jnp.float32),
        w1=w1.astype(mxu_dtype),
        w2=w2.astype(mxu_dtype),
    )


def simple_res_block(x, params, *, tm=256, vmem_limit_bytes=None):
    """x: (..., C);  params: output of prepare_params()."""
    C, Cp = params["C"], params["Cp"]
    mxu_dtype = params["mxu_dtype"]
    orig_shape = x.shape
    assert orig_shape[-1] == C, "channel dim mismatch with prepared params"

    x2d = x.reshape(-1, C)
    N = x2d.shape[0]
    if Cp != C:
        x2d = jnp.pad(x2d, ((0, 0), (0, Cp - C)))

    tm_eff = _pick_tm(N, tm)
    Np = _round_up(N, tm_eff)
    if Np != N:
        x2d = jnp.pad(x2d, ((0, Np - N), (0, 0)))

    kernel = functools.partial(_resblock_kernel, true_c=C, padded_c=Cp,
                               inv_c=1.0 / C, mxu_dtype=mxu_dtype)

    x_itemsize = jnp.dtype(x.dtype).itemsize
    w_itemsize = jnp.dtype(mxu_dtype).itemsize
    cost = pl.CostEstimate(
        flops=4 * Np * Cp * Cp + 12 * Np * Cp,        # 2 matmuls + elementwise
        transcendentals=Np * Cp,                      # erf
        bytes_accessed=(2 * Np * Cp * x_itemsize      # x in + out
                        + 2 * Cp * Cp * w_itemsize    # w1 + w2
                        + 4 * Cp * 4))                # gamma/beta/b1/b2

    def build(single_buffer_params):
        if single_buffer_params:
            # Grid-invariant operands: no point double-buffering them.
            param_spec = lambda shape: pl.BlockSpec(
                shape, lambda i: (0, 0),
                pipeline_mode=pl.Buffered(buffer_count=1))
        else:
            param_spec = lambda shape: pl.BlockSpec(shape, lambda i: (0, 0))

        vmem = vmem_limit_bytes
        if vmem is None:
            vmem = _default_vmem_limit(tm_eff, Cp, x_itemsize, w_itemsize,
                                       single_buffer_params)

        return pl.pallas_call(
            kernel,
            out_shape=jax.ShapeDtypeStruct((Np, Cp), x.dtype),
            grid_spec=pltpu.PrefetchScalarGridSpec(
                num_scalar_prefetch=0,
                grid=(Np // tm_eff,),
                in_specs=[
                    pl.BlockSpec((tm_eff, Cp), lambda i: (i, 0)),   # x tile
                    param_spec((1, Cp)),                            # gamma
                    param_spec((1, Cp)),                            # beta
                    param_spec((Cp, Cp)),                           # w1 (in,out)
                    param_spec((1, Cp)),                            # b1
                    param_spec((Cp, Cp)),                           # w2 (in,out)
                    param_spec((1, Cp)),                            # b2
                ],
                out_specs=pl.BlockSpec((tm_eff, Cp), lambda i: (i, 0)),
            ),
            compiler_params=pltpu.CompilerParams(
                dimension_semantics=("parallel",),
                vmem_limit_bytes=vmem),
            cost_estimate=cost,
        )

    args = (x2d, params["gamma"], params["beta"], params["w1"], params["b1"],
            params["w2"], params["b2"])
    try:
        out = build(single_buffer_params=True)(*args)
    except Exception:
        # Fallback for JAX versions where pl.Buffered(1) single-buffering is
        # not accepted; semantics are identical, just more VMEM used.
        out = build(single_buffer_params=False)(*args)

    return out[:N, :C].reshape(orig_shape)


def _reference(x, gamma, beta, w1, b1, w2, b2):
    xf = x.astype(jnp.float32)
    mean = jnp.mean(xf, axis=-1, keepdims=True)
    var = jnp.mean((xf - mean) ** 2, axis=-1, keepdims=True)
    xn = (xf - mean) / jnp.sqrt(var + LN_EPS) * gamma + beta
    h = xn @ w1 + b1
    h = jax.nn.gelu(h, approximate=False)
    y = h @ w2 + b2
    return (xn + y).astype(x.dtype)


if __name__ == "__main__":
    key = jax.random.PRNGKey(0)
    B, S, C = 2, 8, 32  # batch, seq, channels (small test shapes)

    k = jax.random.split(key, 5)
    x = jax.random.normal(k[0], (B, S, C), dtype=jnp.float32)
    gamma = jnp.ones((C,), jnp.float32)          # LayerNorm default init
    beta = jnp.zeros((C,), jnp.float32)
    # nn.Linear weight is (out, in); store transposed (in, out) for x @ W.
    w1 = jax.random.normal(k[1], (C, C), jnp.float32) * (1.0 / math.sqrt(C))
    b1 = jax.random.normal(k[2], (C,), jnp.float32) * 0.01
    w2 = jax.random.normal(k[3], (C, C), jnp.float32) * (1.0 / math.sqrt(C))
    b2 = jax.random.normal(k[4], (C,), jnp.float32) * 0.01

    ref = _reference(x, gamma, beta, w1, b1, w2, b2)

    # f32-fed MXU path: should match the reference tightly.
    params_f32 = prepare_params(gamma, beta, w1, b1, w2, b2,
                                mxu_dtype=jnp.float32)
    out_f32 = jax.block_until_ready(simple_res_block(x, params_f32))
    assert out_f32.shape == x.shape and out_f32.dtype == x.dtype
    assert jnp.allclose(out_f32, ref, atol=1e-4, rtol=1e-4), "f32 path mismatch"

    # Default bf16-fed MXU path (f32 accumulation): looser tolerance.
    params_bf16 = prepare_params(gamma, beta, w1, b1, w2, b2,
                                 mxu_dtype=jnp.bfloat16)
    out_bf16 = jax.block_until_ready(simple_res_block(x, params_bf16))
    assert out_bf16.shape == x.shape and out_bf16.dtype == x.dtype
    assert jnp.allclose(out_bf16, ref, atol=5e-2, rtol=5e-2), "bf16 path mismatch"

    print("KERNEL_OK")
</pallas_src>

<mosaic_0001>
module attributes {stable_mosaic.version = 11 : i64} {
  func.func @_resblock_kernel(%arg0: i32, %arg1: memref<16x128xf32, #tpu.memory_space<vmem>>, %arg2: memref<1x128xf32, #tpu.memory_space<vmem>>, %arg3: memref<1x128xf32, #tpu.memory_space<vmem>>, %arg4: memref<128x128xf32, #tpu.memory_space<vmem>>, %arg5: memref<1x128xf32, #tpu.memory_space<vmem>>, %arg6: memref<128x128xf32, #tpu.memory_space<vmem>>, %arg7: memref<1x128xf32, #tpu.memory_space<vmem>>, %arg8: memref<16x128xf32, #tpu.memory_space<vmem>>) attributes {dimension_semantics = [#tpu.dimension_semantics<parallel>], iteration_bounds = array<i64: 1>, scalar_prefetch = 0 : i64, scratch_operands = 0 : i64, tpu.core_type = #tpu.core_type<tc>, window_params = [{transform_indices = @transform_0, window_bounds = array<i64: 16, 128>}, {pipeline_mode = #tpu.pipeline_mode<synchronous>, transform_indices = @transform_1, window_bounds = array<i64: 1, 128>}, {pipeline_mode = #tpu.pipeline_mode<synchronous>, transform_indices = @transform_2, window_bounds = array<i64: 1, 128>}, {pipeline_mode = #tpu.pipeline_mode<synchronous>, transform_indices = @transform_3, window_bounds = array<i64: 128, 128>}, {pipeline_mode = #tpu.pipeline_mode<synchronous>, transform_indices = @transform_4, window_bounds = array<i64: 1, 128>}, {pipeline_mode = #tpu.pipeline_mode<synchronous>, transform_indices = @transform_5, window_bounds = array<i64: 128, 128>}, {pipeline_mode = #tpu.pipeline_mode<synchronous>, transform_indices = @transform_6, window_bounds = array<i64: 1, 128>}, {transform_indices = @transform_7, window_bounds = array<i64: 16, 128>}]} {
    %c0 = arith.constant 0 : index
    %c0_0 = arith.constant 0 : index
    %0 = vector.load %arg1[%c0, %c0_0] : memref<16x128xf32, #tpu.memory_space<vmem>>, vector<16x128xf32>
    %cst = arith.constant dense<0.000000e+00> : vector<16xf32>
    %1 = vector.multi_reduction <add>, %0, %cst [1] : vector<16x128xf32> to vector<16xf32>
    %2 = vector.shape_cast %1 : vector<16xf32> to vector<16x1xf32>
    %cst_1 = arith.constant 3.125000e-02 : f32
    %3 = vector.broadcast %cst_1 : f32 to vector<16x1xf32>
    %4 = arith.mulf %2, %3 : vector<16x1xf32>
    %5 = vector.broadcast %4 : vector<16x1xf32> to vector<16x128xf32>
    %6 = arith.subf %0, %5 : vector<16x128xf32>
    %7 = tpu.iota {dimensions = array<i32: 1>} : vector<1x128xi32>
    %c32_i32 = arith.constant 32 : i32
    %8 = vector.broadcast %c32_i32 : i32 to vector<1x128xi32>
    %9 = arith.cmpi slt, %7, %8 : vector<1x128xi32>
    %cst_2 = arith.constant 0.000000e+00 : f32
    %10 = vector.shape_cast %9 : vector<1x128xi1> to vector<1x128xi1>
    %11 = vector.broadcast %10 : vector<1x128xi1> to vector<16x128xi1>
    %12 = vector.broadcast %cst_2 : f32 to vector<16x128xf32>
    %13 = arith.select %11, %6, %12 : vector<16x128xi1>, vector<16x128xf32>
    %14 = arith.mulf %13, %13 : vector<16x128xf32>
    %cst_3 = arith.constant dense<0.000000e+00> : vector<16xf32>
    %15 = vector.multi_reduction <add>, %14, %cst_3 [1] : vector<16x128xf32> to vector<16xf32>
    %16 = vector.shape_cast %15 : vector<16xf32> to vector<16x1xf32>
    %cst_4 = arith.constant 3.125000e-02 : f32
    %17 = vector.broadcast %cst_4 : f32 to vector<16x1xf32>
    %18 = arith.mulf %16, %17 : vector<16x1xf32>
    %cst_5 = arith.constant 9.99999974E-6 : f32
    %19 = vector.broadcast %cst_5 : f32 to vector<16x1xf32>
    %20 = arith.addf %18, %19 : vector<16x1xf32>
    %21 = math.rsqrt %20 : vector<16x1xf32>
    %22 = vector.broadcast %21 : vector<16x1xf32> to vector<16x128xf32>
    %23 = arith.mulf %6, %22 : vector<16x128xf32>
    %c0_6 = arith.constant 0 : index
    %c0_7 = arith.constant 0 : index
    %24 = vector.load %arg2[%c0_6, %c0_7] : memref<1x128xf32, #tpu.memory_space<vmem>>, vector<1x128xf32>
    %25 = vector.broadcast %24 : vector<1x128xf32> to vector<16x128xf32>
    %26 = arith.mulf %23, %25 : vector<16x128xf32>
    %c0_8 = arith.constant 0 : index
    %c0_9 = arith.constant 0 : index
    %27 = vector.load %arg3[%c0_8, %c0_9] : memref<1x128xf32, #tpu.memory_space<vmem>>, vector<1x128xf32>
    %28 = vector.broadcast %27 : vector<1x128xf32> to vector<16x128xf32>
    %29 = arith.addf %26, %28 : vector<16x128xf32>
    %c0_10 = arith.constant 0 : index
    %c0_11 = arith.constant 0 : index
    %30 = vector.load %arg4[%c0_10, %c0_11] : memref<128x128xf32, #tpu.memory_space<vmem>>, vector<128x128xf32>
    %cst_12 = arith.constant dense<0.000000e+00> : vector<16x128xf32>
    %31 = tpu.matmul %29, %30, %cst_12 {dimension_numbers = #tpu.dot_dimension_numbers<[1], [0], [0], [1], [0, 0, 1, 1], [], []>} : vector<16x128xf32>, vector<128x128xf32>, vector<16x128xf32> -> vector<16x128xf32>
    %c0_13 = arith.constant 0 : index
    %c0_14 = arith.constant 0 : index
    %32 = vector.load %arg5[%c0_13, %c0_14] : memref<1x128xf32, #tpu.memory_space<vmem>>, vector<1x128xf32>
    %33 = vector.broadcast %32 : vector<1x128xf32> to vector<16x128xf32>
    %34 = arith.addf %31, %33 : vector<16x128xf32>
    %cst_15 = arith.constant 5.000000e-01 : f32
    %35 = vector.broadcast %cst_15 : f32 to vector<16x128xf32>
    %36 = arith.mulf %35, %34 : vector<16x128xf32>
    %cst_16 = arith.constant 0.707106769 : f32
    %37 = vector.broadcast %cst_16 : f32 to vector<16x128xf32>
    %38 = arith.mulf %34, %37 : vector<16x128xf32>
    %39 = math.erf %38 : vector<16x128xf32>
    %cst_17 = arith.constant 1.000000e+00 : f32
    %40 = vector.broadcast %cst_17 : f32 to vector<16x128xf32>
    %41 = arith.addf %40, %39 : vector<16x128xf32>
    %42 = arith.mulf %36, %41 : vector<16x128xf32>
    %c0_18 = arith.constant 0 : index
    %c0_19 = arith.constant 0 : index
    %43 = vector.load %arg6[%c0_18, %c0_19] : memref<128x128xf32, #tpu.memory_space<vmem>>, vector<128x128xf32>
    %cst_20 = arith.constant dense<0.000000e+00> : vector<16x128xf32>
    %44 = tpu.matmul %42, %43, %cst_20 {dimension_numbers = #tpu.dot_dimension_numbers<[1], [0], [0], [1], [0, 0, 1, 1], [], []>} : vector<16x128xf32>, vector<128x128xf32>, vector<16x128xf32> -> vector<16x128xf32>
    %c0_21 = arith.constant 0 : index
    %c0_22 = arith.constant 0 : index
    %45 = vector.load %arg7[%c0_21, %c0_22] : memref<1x128xf32, #tpu.memory_space<vmem>>, vector<1x128xf32>
    %46 = vector.broadcast %45 : vector<1x128xf32> to vector<16x128xf32>
    %47 = arith.addf %44, %46 : vector<16x128xf32>
    %48 = arith.addf %29, %47 : vector<16x128xf32>
    %c0_23 = arith.constant 0 : index
    %c0_24 = arith.constant 0 : index
    %49 = vector.load %arg8[%c0_23, %c0_24] : memref<16x128xf32, #tpu.memory_space<vmem>>, vector<16x128xf32>
    tpu.vector_store %arg8[%c0_23, %c0_24], %48 {strides = array<i32>} : memref<16x128xf32, #tpu.memory_space<vmem>>, vector<16x128xf32>,
    return
  }
  func.func @transform_0(%arg0: i32) -> (i32, i32) {
    %c0_i32 = arith.constant 0 : i32
    %c0_i32_0 = arith.constant 0 : i32
    return %arg0, %c0_i32 : i32, i32
  }
  func.func @transform_1(%arg0: i32) -> (i32, i32) {
    %c0_i32 = arith.constant 0 : i32
    %c0_i32_0 = arith.constant 0 : i32
    %c0_i32_1 = arith.constant 0 : i32
    return %c0_i32, %c0_i32_0 : i32, i32
  }
  func.func @transform_2(%arg0: i32) -> (i32, i32) {
    %c0_i32 = arith.constant 0 : i32
    %c0_i32_0 = arith.constant 0 : i32
    %c0_i32_1 = arith.constant 0 : i32
    return %c0_i32, %c0_i32_0 : i32, i32
  }
  func.func @transform_3(%arg0: i32) -> (i32, i32) {
    %c0_i32 = arith.constant 0 : i32
    %c0_i32_0 = arith.constant 0 : i32
    %c0_i32_1 = arith.constant 0 : i32
    return %c0_i32, %c0_i32_0 : i32, i32
  }
  func.func @transform_4(%arg0: i32) -> (i32, i32) {
    %c0_i32 = arith.constant 0 : i32
    %c0_i32_0 = arith.constant 0 : i32
    %c0_i32_1 = arith.constant 0 : i32
    return %c0_i32, %c0_i32_0 : i32, i32
  }
  func.func @transform_5(%arg0: i32) -> (i32, i32) {
    %c0_i32 = arith.constant 0 : i32
    %c0_i32_0 = arith.constant 0 : i32
    %c0_i32_1 = arith.constant 0 : i32
    return %c0_i32, %c0_i32_0 : i32, i32
  }
  func.func @transform_6(%arg0: i32) -> (i32, i32) {
    %c0_i32 = arith.constant 0 : i32
    %c0_i32_0 = arith.constant 0 : i32
    %c0_i32_1 = arith.constant 0 : i32
    return %c0_i32, %c0_i32_0 : i32, i32
  }
  func.func @transform_7(%arg0: i32) -> (i32, i32) {
    %c0_i32 = arith.constant 0 : i32
    %c0_i32_0 = arith.constant 0 : i32
    return %arg0, %c0_i32 : i32, i32
  }
}

module attributes {stable_mosaic.version = 11 : i64} {
  func.func @_resblock_kernel(%arg0: i32, %arg1: memref<16x128xf32, #tpu.memory_space<vmem>>, %arg2: memref<1x128xf32, #tpu.memory_space<vmem>>, %arg3: memref<1x128xf32, #tpu.memory_space<vmem>>, %arg4: memref<128x128xf32, #tpu.memory_space<vmem>>, %arg5: memref<1x128xf32, #tpu.memory_space<vmem>>, %arg6: memref<128x128xf32, #tpu.memory_space<vmem>>, %arg7: memref<1x128xf32, #tpu.memory_space<vmem>>, %arg8: memref<16x128xf32, #tpu.memory_space<vmem>>) attributes {dimension_semantics = [#tpu.dimension_semantics<parallel>], iteration_bounds = array<i64: 1>, scalar_prefetch = 0 : i64, scratch_operands = 0 : i64, tpu.core_type = #tpu.core_type<tc>, window_params = [{transform_indices = @transform_0, window_bounds = array<i64: 16, 128>}, {pipeline_mode = #tpu.pipeline_mode<synchronous>, transform_indices = @transform_1, window_bounds = array<i64: 1, 128>}, {pipeline_mode = #tpu.pipeline_mode<synchronous>, transform_indices = @transform_2, window_bounds = array<i64: 1, 128>}, {pipeline_mode = #tpu.pipeline_mode<synchronous>, transform_indices = @transform_3, window_bounds = array<i64: 128, 128>}, {pipeline_mode = #tpu.pipeline_mode<synchronous>, transform_indices = @transform_4, window_bounds = array<i64: 1, 128>}, {pipeline_mode = #tpu.pipeline_mode<synchronous>, transform_indices = @transform_5, window_bounds = array<i64: 128, 128>}, {pipeline_mode = #tpu.pipeline_mode<synchronous>, transform_indices = @transform_6, window_bounds = array<i64: 1, 128>}, {transform_indices = @transform_7, window_bounds = array<i64: 16, 128>}]} {
    %c0 = arith.constant 0 : index
    %c0_0 = arith.constant 0 : index
    %0 = vector.load %arg1[%c0, %c0_0] : memref<16x128xf32, #tpu.memory_space<vmem>>, vector<16x128xf32>
    %cst = arith.constant dense<0.000000e+00> : vector<16xf32>
    %1 = vector.multi_reduction <add>, %0, %cst [1] : vector<16x128xf32> to vector<16xf32>
    %2 = vector.shape_cast %1 : vector<16xf32> to vector<16x1xf32>
    %cst_1 = arith.constant 3.125000e-02 : f32
    %3 = vector.broadcast %cst_1 : f32 to vector<16x1xf32>
    %4 = arith.mulf %2, %3 : vector<16x1xf32>
    %5 = vector.broadcast %4 : vector<16x1xf32> to vector<16x128xf32>
    %6 = arith.subf %0, %5 : vector<16x128xf32>
    %7 = tpu.iota {dimensions = array<i32: 1>} : vector<1x128xi32>
    %c32_i32 = arith.constant 32 : i32
    %8 = vector.broadcast %c32_i32 : i32 to vector<1x128xi32>
    %9 = arith.cmpi slt, %7, %8 : vector<1x128xi32>
    %cst_2 = arith.constant 0.000000e+00 : f32
    %10 = vector.shape_cast %9 : vector<1x128xi1> to vector<1x128xi1>
    %11 = vector.broadcast %10 : vector<1x128xi1> to vector<16x128xi1>
    %12 = vector.broadcast %cst_2 : f32 to vector<16x128xf32>
    %13 = arith.select %11, %6, %12 : vector<16x128xi1>, vector<16x128xf32>
    %14 = arith.mulf %13, %13 : vector<16x128xf32>
    %cst_3 = arith.constant dense<0.000000e+00> : vector<16xf32>
    %15 = vector.multi_reduction <add>, %14, %cst_3 [1] : vector<16x128xf32> to vector<16xf32>
    %16 = vector.shape_cast %15 : vector<16xf32> to vector<16x1xf32>
    %cst_4 = arith.constant 3.125000e-02 : f32
    %17 = vector.broadcast %cst_4 : f32 to vector<16x1xf32>
    %18 = arith.mulf %16, %17 : vector<16x1xf32>
    %cst_5 = arith.constant 9.99999974E-6 : f32
    %19 = vector.broadcast %cst_5 : f32 to vector<16x1xf32>
    %20 = arith.addf %18, %19 : vector<16x1xf32>
    %21 = math.rsqrt %20 : vector<16x1xf32>
    %22 = vector.broadcast %21 : vector<16x1xf32> to vector<16x128xf32>
    %23 = arith.mulf %6, %22 : vector<16x128xf32>
    %c0_6 = arith.constant 0 : index
    %c0_7 = arith.constant 0 : index
    %24 = vector.load %arg2[%c0_6, %c0_7] : memref<1x128xf32, #tpu.memory_space<vmem>>, vector<1x128xf32>
    %25 = vector.broadcast %24 : vector<1x128xf32> to vector<16x128xf32>
    %26 = arith.mulf %23, %25 : vector<16x128xf32>
    %c0_8 = arith.constant 0 : index
    %c0_9 = arith.constant 0 : index
    %27 = vector.load %arg3[%c0_8, %c0_9] : memref<1x128xf32, #tpu.memory_space<vmem>>, vector<1x128xf32>
    %28 = vector.broadcast %27 : vector<1x128xf32> to vector<16x128xf32>
    %29 = arith.addf %26, %28 : vector<16x128xf32>
    %c0_10 = arith.constant 0 : index
    %c0_11 = arith.constant 0 : index
    %30 = vector.load %arg4[%c0_10, %c0_11] : memref<128x128xf32, #tpu.memory_space<vmem>>, vector<128x128xf32>
    %cst_12 = arith.constant dense<0.000000e+00> : vector<16x128xf32>
    %31 = tpu.matmul %29, %30, %cst_12 {dimension_numbers = #tpu.dot_dimension_numbers<[1], [0], [0], [1], [0, 0, 1, 1], [], []>} : vector<16x128xf32>, vector<128x128xf32>, vector<16x128xf32> -> vector<16x128xf32>
    %c0_13 = arith.constant 0 : index
    %c0_14 = arith.constant 0 : index
    %32 = vector.load %arg5[%c0_13, %c0_14] : memref<1x128xf32, #tpu.memory_space<vmem>>, vector<1x128xf32>
    %33 = vector.broadcast %32 : vector<1x128xf32> to vector<16x128xf32>
    %34 = arith.addf %31, %33 : vector<16x128xf32>
    %cst_15 = arith.constant 5.000000e-01 : f32
    %35 = vector.broadcast %cst_15 : f32 to vector<16x128xf32>
    %36 = arith.mulf %35, %34 : vector<16x128xf32>
    %cst_16 = arith.constant 0.707106769 : f32
    %37 = vector.broadcast %cst_16 : f32 to vector<16x128xf32>
    %38 = arith.mulf %34, %37 : vector<16x128xf32>
    %39 = math.erf %38 : vector<16x128xf32>
    %cst_17 = arith.constant 1.000000e+00 : f32
    %40 = vector.broadcast %cst_17 : f32 to vector<16x128xf32>
    %41 = arith.addf %40, %39 : vector<16x128xf32>
    %42 = arith.mulf %36, %41 : vector<16x128xf32>
    %c0_18 = arith.constant 0 : index
    %c0_19 = arith.constant 0 : index
    %43 = vector.load %arg6[%c0_18, %c0_19] : memref<128x128xf32, #tpu.memory_space<vmem>>, vector<128x128xf32>
    %cst_20 = arith.constant dense<0.000000e+00> : vector<16x128xf32>
    %44 = tpu.matmul %42, %43, %cst_20 {dimension_numbers = #tpu.dot_dimension_numbers<[1], [0], [0], [1], [0, 0, 1, 1], [], []>} : vector<16x128xf32>, vector<128x128xf32>, vector<16x128xf32> -> vector<16x128xf32>
    %c0_21 = arith.constant 0 : index
    %c0_22 = arith.constant 0 : index
    %45 = vector.load %arg7[%c0_21, %c0_22] : memref<1x128xf32, #tpu.memory_space<vmem>>, vector<1x128xf32>
    %46 = vector.broadcast %45 : vector<1x128xf32> to vector<16x128xf32>
    %47 = arith.addf %44, %46 : vector<16x128xf32>
    %48 = arith.addf %29, %47 : vector<16x128xf32>
    %c0_23 = arith.constant 0 : index
    %c0_24 = arith.constant 0 : index
    %49 = vector.load %arg8[%c0_23, %c0_24] : memref<16x128xf32, #tpu.memory_space<vmem>>, vector<16x128xf32>
    tpu.vector_store %arg8[%c0_23, %c0_24], %48 {strides = array<i32>} : memref<16x128xf32, #tpu.memory_space<vmem>>, vector<16x128xf32>,
    return
  }
  func.func @transform_0(%arg0: i32) -> (i32, i32) {
    %c0_i32 = arith.constant 0 : i32
    %c0_i32_0 = arith.constant 0 : i32
    return %arg0, %c0_i32 : i32, i32
  }
  func.func @transform_1(%arg0: i32) -> (i32, i32) {
    %c0_i32 = arith.constant 0 : i32
    %c0_i32_0 = arith.constant 0 : i32
    %c0_i32_1 = arith.constant 0 : i32
    return %c0_i32, %c0_i32_0 : i32, i32
  }
  func.func @transform_2(%arg0: i32) -> (i32, i32) {
    %c0_i32 = arith.constant 0 : i32
    %c0_i32_0 = arith.constant 0 : i32
    %c0_i32_1 = arith.constant 0 : i32
    return %c0_i32, %c0_i32_0 : i32, i32
  }
  func.func @transform_3(%arg0: i32) -> (i32, i32) {
    %c0_i32 = arith.constant 0 : i32
    %c0_i32_0 = arith.constant 0 : i32
    %c0_i32_1 = arith.constant 0 : i32
    return %c0_i32, %c0_i32_0 : i32, i32
  }
  func.func @transform_4(%arg0: i32) -> (i32, i32) {
    %c0_i32 = arith.constant 0 : i32
    %c0_i32_0 = arith.constant 0 : i32
    %c0_i32_1 = arith.constant 0 : i32
    return %c0_i32, %c0_i32_0 : i32, i32
  }
  func.func @transform_5(%arg0: i32) -> (i32, i32) {
    %c0_i32 = arith.constant 0 : i32
    %c0_i32_0 = arith.constant 0 : i32
    %c0_i32_1 = arith.constant 0 : i32
    return %c0_i32, %c0_i32_0 : i32, i32
  }
  func.func @transform_6(%arg0: i32) -> (i32, i32) {
    %c0_i32 = arith.constant 0 : i32
    %c0_i32_0 = arith.constant 0 : i32
    %c0_i32_1 = arith.constant 0 : i32
    return %c0_i32, %c0_i32_0 : i32, i32
  }
  func.func @transform_7(%arg0: i32) -> (i32, i32) {
    %c0_i32 = arith.constant 0 : i32
    %c0_i32_0 = arith.constant 0 : i32
    return %arg0, %c0_i32 : i32, i32
  }
}

</mosaic_0001>

<llo_original>
// kernel: tpu_custom_call.1
$region0: #{tpu_custom_call.1}
  #allocation0 [shape = 'u32[]', space=smem, size = 0x4, offset = 0x4, fixed_abs, tag = 'smem constant byte address 0x4 - core index']
  #allocation1 [shape = 'u32[144,128]{1,0:T(1,128)}', space=vmem, size = 0x12000, scoped, tag = 'internal scratch']
  %s0 = inlined_call_operand.hbm [shape: f32[16,128], index: 0, kind: input, shape index: {}]
  %s1 = inlined_call_operand.vmem [shape: f32[1,128], index: 1, kind: input, shape index: {}]
  %s2 = inlined_call_operand.vmem [shape: f32[1,128], index: 2, kind: input, shape index: {}]
  %s3 = inlined_call_operand.hbm [shape: f32[128,128], index: 3, kind: input, shape index: {}]
  %s4 = inlined_call_operand.vmem [shape: f32[1,128], index: 4, kind: input, shape index: {}]
  %s5 = inlined_call_operand.hbm [shape: f32[128,128], index: 5, kind: input, shape index: {}]
  %s6 = inlined_call_operand.vmem [shape: f32[1,128], index: 6, kind: input, shape index: {}]
  %s7 = inlined_call_operand.hbm [shape: f32[16,128], index: 7, kind: output, shape index: {}]
  %s8 = sld [smem:[#allocation0]]
  $region50: #{tpu_custom_call.1} parent=0
    _
  %s10 = ssub.s32 1, %s8
  %s11 = scalar_select 0, %s10, %s8
  $region1: #{tpu_custom_call.1} parent=0
    #allocation2 [shape = 'u8[8192]{0}', space=vmem, size = 0x2000, scoped, tag = 'input window, operand 0, single buffered']
    #allocation3 [shape = 's32[1]{0}', space=sflag, size = 0x4, scoped, tag = 'scoped memory for tpu_custom_call.1']
    #allocation4 [shape = 's32[1]{0}', space=sflag, size = 0x4, scoped, tag = 'scoped memory for tpu_custom_call.1']
    #allocation5 [shape = 'u8[65536]{0}', space=vmem, size = 0x10000, scoped, tag = 'input window, operand 3, single buffered']
    #allocation6 [shape = 's32[1]{0}', space=sflag, size = 0x4, scoped, tag = 'scoped memory for tpu_custom_call.1']
    #allocation7 [shape = 'u8[65536]{0}', space=vmem, size = 0x10000, scoped, tag = 'input window, operand 5, single buffered']
    #allocation8 [shape = 'u8[8192]{0}', space=vmem, size = 0x2000, scoped, tag = 'output window, operand 0, single buffered']
    %12 = vsyncpa [#allocation3], 0
    %13 = vsyncpa [#allocation6], 0
    %14 = vsyncpa [#allocation4], 0
    // Predicated region
    $region2: #{tpu_custom_call.1} parent=1 // pred_check
      _
    $region3: #{tpu_custom_call.1} parent=1 // pred_check_branch
      %16 = sbr.rel (0) target = $region5
    $region4: #{tpu_custom_call.1} parent=1 // pred_region
      %s18 = ssub.s32 256, 256
      %19 = vsyncadd [#allocation3], %s18
      %s20 = sshll.u32 [#allocation2], 4
      %s21 = int_to_ptr.vmem [resolvable:$true] %s20
      %26 = dma.hbm_to_vmem [thread:$0]  %s0, 256, %s21, [#allocation3], 128, 128, 8
    $region5: #{tpu_custom_call.1} parent=1 // pred_fallthru
      _
    // Predicated region
    $region6: #{tpu_custom_call.1} parent=1 // pred_check
      _
    $region7: #{tpu_custom_call.1} parent=1 // pred_check_branch
      %28 = sbr.rel (0) target = $region9
    $region8: #{tpu_custom_call.1} parent=1 // pred_region
      _
    $region9: #{tpu_custom_call.1} parent=1 // pred_fallthru
      _
    // Predicated region
    $region10: #{tpu_custom_call.1} parent=1 // pred_check
      _
    $region11: #{tpu_custom_call.1} parent=1 // pred_check_branch
      %30 = sbr.rel (0) target = $region13
    $region12: #{tpu_custom_call.1} parent=1 // pred_region
      _
    $region13: #{tpu_custom_call.1} parent=1 // pred_fallthru
      _
    // Predicated region
    $region14: #{tpu_custom_call.1} parent=1 // pred_check
      _
    $region15: #{tpu_custom_call.1} parent=1 // pred_check_branch
      %32 = sbr.rel (0) target = $region17
    $region16: #{tpu_custom_call.1} parent=1 // pred_region
      %s34 = ssub.s32 2048, 2048
      %35 = vsyncadd [#allocation6], %s34
      %s36 = sshll.u32 [#allocation5], 4
      %s37 = int_to_ptr.vmem [resolvable:$true] %s36
      %42 = dma.hbm_to_vmem [thread:$0]  %s3, 2048, %s37, [#allocation6], 128, 128, 8
    $region17: #{tpu_custom_call.1} parent=1 // pred_fallthru
      _
    // Predicated region
    $region18: #{tpu_custom_call.1} parent=1 // pred_check
      _
    $region19: #{tpu_custom_call.1} parent=1 // pred_check_branch
      %44 = sbr.rel (0) target = $region21
    $region20: #{tpu_custom_call.1} parent=1 // pred_region
      _
    $region21: #{tpu_custom_call.1} parent=1 // pred_fallthru
      _
    // Predicated region
    $region22: #{tpu_custom_call.1} parent=1 // pred_check
      _
    $region23: #{tpu_custom_call.1} parent=1 // pred_check_branch
      %46 = sbr.rel (0) target = $region25
    $region24: #{tpu_custom_call.1} parent=1 // pred_region
      %s48 = ssub.s32 2048, 2048
      %49 = vsyncadd [#allocation6], %s48
      %s50 = sshll.u32 [#allocation7], 4
      %s51 = int_to_ptr.vmem [resolvable:$true] %s50
      %56 = dma.hbm_to_vmem [thread:$0]  %s5, 2048, %s51, [#allocation6], 128, 128, 8
    $region25: #{tpu_custom_call.1} parent=1 // pred_fallthru
      _
    // Predicated region
    $region26: #{tpu_custom_call.1} parent=1 // pred_check
      _
    $region27: #{tpu_custom_call.1} parent=1 // pred_check_branch
      %58 = sbr.rel (0) target = $region29
    $region28: #{tpu_custom_call.1} parent=1 // pred_region
      _
    $region29: #{tpu_custom_call.1} parent=1 // pred_fallthru
      _
    // Predicated region
    $region30: #{tpu_custom_call.1} parent=1 // pred_check
      _
    $region31: #{tpu_custom_call.1} parent=1 // pred_check_branch
      %60 = sbr.rel (0) target = $region33
    $region32: #{tpu_custom_call.1} parent=1 // pred_region
      %61 = dma.done [#allocation3], 256
    $region33: #{tpu_custom_call.1} parent=1 // pred_fallthru
      _
    // Predicated region
    $region34: #{tpu_custom_call.1} parent=1 // pred_check
      _
    $region35: #{tpu_custom_call.1} parent=1 // pred_check_branch
      %63 = sbr.rel (0) target = $region37
    $region36: #{tpu_custom_call.1} parent=1 // pred_region
      %64 = dma.done [#allocation6], 2048
    $region37: #{tpu_custom_call.1} parent=1 // pred_fallthru
      _
    // Predicated region
    $region38: #{tpu_custom_call.1} parent=1 // pred_check
      _
    $region39: #{tpu_custom_call.1} parent=1 // pred_check_branch
      %66 = sbr.rel (0) target = $region41
    $region40: #{tpu_custom_call.1} parent=1 // pred_region
      %67 = dma.done [#allocation6], 2048
    $region41: #{tpu_custom_call.1} parent=1 // pred_fallthru
      _
    %v68 = vld [vmem:[#allocation2] sm:$0xff]
    %v69 = vld [vmem:[#allocation2 + $0x8] sm:$0xff]
    %70 = vadd.xlane.f32.xlu0 %v68
    %v71 = vpop.xlane.xlu0 %70
    %72 = vadd.xlane.f32.xlu0 %v69
    %v73 = vpop.xlane.xlu0 %72
    %v74 = vmul.f32 %v71, 0.03125
    %v75 = vmul.f32 %v73, 0.03125
    %v76 = vsub.f32 %v68, %v74
    %v77 = vsub.f32 %v69, %v75
    %v78 = vlaneseq
    %v79 = vand.u32 %v78, 127
    %vm80 = vcmp.lt.s32.totalorder %v79, 32
    %v81 = vsel %vm80, 1, 0
    %vm82 = vcmp.eq.s32.totalorder %v81, 1
    %v83 = vsel %vm82, %v76, 0.0
    %v84 = vsel %vm82, %v77, 0.0
    %v85 = vmul.f32 %v83, %v83
    %v86 = vmul.f32 %v84, %v84
    %87 = vadd.xlane.f32.xlu0 %v85
    %v88 = vpop.xlane.xlu0 %87
    %89 = vadd.xlane.f32.xlu0 %v86
    %v90 = vpop.xlane.xlu0 %89
    %v91 = vmul.f32 %v88, 0.03125
    %v92 = vmul.f32 %v90, 0.03125
    %v93 = vadd.f32 %v91, 1e-05
    %v94 = vadd.f32 %v92, 1e-05
    %v95 = vrsqrt.pop %v93
    %v96 = vrsqrt.pop %v94
    %v97 = vmul.f32 %v76, %v95
    %v98 = vmul.f32 %v77, %v96
    %v99 = vld [vmem:[%s1] sm:$0x1]
    %v101 = vlaneseq
    %v102 = vshrl.u32 %v101, 7
    %v103 = vsub.s32 0, %v102
    %v104 = vrot.slane %v99, %v103
    %v106 = vmul.f32 %v97, %v104
    %v107 = vmul.f32 %v98, %v104
    %v108 = vld [vmem:[%s2] sm:$0x1]
    %v110 = vlaneseq
    %v111 = vshrl.u32 %v110, 7
    %v112 = vsub.s32 0, %v111
    %v113 = vrot.slane %v108, %v112
    %v115 = vadd.f32 %v106, %v113
    %v116 = vadd.f32 %v107, %v113
    %v117 = vld [vmem:[#allocation5] sm:$0xff]
    %v118 = vld [vmem:[#allocation5 + $0x8] sm:$0xff]
    %v119 = vld [vmem:[#allocation5 + $0x10] sm:$0xff]
    %v120 = vld [vmem:[#allocation5 + $0x18] sm:$0xff]
    %v121 = vld [vmem:[#allocation5 + $0x20] sm:$0xff]
    %v122 = vld [vmem:[#allocation5 + $0x28] sm:$0xff]
    %v123 = vld [vmem:[#allocation5 + $0x30] sm:$0xff]
    %v124 = vld [vmem:[#allocation5 + $0x38] sm:$0xff]
    %v125 = vld [vmem:[#allocation5 + $0x40] sm:$0xff]
    %v126 = vld [vmem:[#allocation5 + $0x48] sm:$0xff]
    %v127 = vld [vmem:[#allocation5 + $0x50] sm:$0xff]
    %v128 = vld [vmem:[#allocation5 + $0x58] sm:$0xff]
    %v129 = vld [vmem:[#allocation5 + $0x60] sm:$0xff]
    %v130 = vld [vmem:[#allocation5 + $0x68] sm:$0xff]
    %v131 = vld [vmem:[#allocation5 + $0x70] sm:$0xff]
    %v132 = vld [vmem:[#allocation5 + $0x78] sm:$0xff]
    %v133 = vld [vmem:[%s4] sm:$0x1]
    %v135 = vlaneseq
    %v136 = vshrl.u32 %v135, 7
    %v137 = vsub.s32 0, %v136
    %v138 = vrot.slane %v133, %v137
    %140 = vmatprep.subr.mxu0 0.0
    %141 = vmatpush1.msra.mxu0 %v117
    %142 = vmatprep.subr.mxu0 0.0
    %143 = vmatpush1.msra.mxu0 %v118
    %144 = vmatprep.subr.mxu0 0.0
    %145 = vmatpush1.msra.mxu0 %v119
    %146 = vmatprep.subr.mxu0 0.0
    %147 = vmatpush1.msra.mxu0 %v120
    %148 = vmatprep.subr.mxu0 0.0
    %149 = vmatpush1.msra.mxu0 %v121
    %150 = vmatprep.subr.mxu0 0.0
    %151 = vmatpush1.msra.mxu0 %v122
    %152 = vmatprep.subr.mxu0 0.0
    %153 = vmatpush1.msra.mxu0 %v123
    %154 = vmatprep.subr.mxu0 0.0
    %155 = vmatpush1.msra.mxu0 %v124
    %156 = vmatprep.subr.mxu0 0.0
    %157 = vmatpush1.msra.mxu0 %v125
    %158 = vmatprep.subr.mxu0 0.0
    %159 = vmatpush1.msra.mxu0 %v126
    %160 = vmatprep.subr.mxu0 0.0
    %161 = vmatpush1.msra.mxu0 %v127
    %162 = vmatprep.subr.mxu0 0.0
    %163 = vmatpush1.msra.mxu0 %v128
    %164 = vmatprep.subr.mxu0 0.0
    %165 = vmatpush1.msra.mxu0 %v129
    %166 = vmatprep.subr.mxu0 0.0
    %167 = vmatpush1.msra.mxu0 %v130
    %168 = vmatprep.subr.mxu0 0.0
    %169 = vmatpush1.msra.mxu0 %v131
    %170 = vmatprep.subr.mxu0 0.0
    %171 = vmatpush1.msra.mxu0 %v132
    %172 = vmatprep.subr.mxu0 0.0
    %173 = vmatpush1.msra.mxu0 0.0
    %174 = vmatprep.subr.mxu0 0.0
    %175 = vmatpush1.msra.mxu0 0.0
    %176 = vmatprep.subr.mxu0 0.0
    %177 = vmatpush1.msra.mxu0 0.0
    %178 = vmatprep.subr.mxu0 0.0
    %179 = vmatpush1.msra.mxu0 0.0
    %180 = vmatprep.subr.mxu0 0.0
    %181 = vmatpush1.msra.mxu0 0.0
    %182 = vmatprep.subr.mxu0 0.0
    %183 = vmatpush1.msra.mxu0 0.0
    %184 = vmatprep.subr.mxu0 0.0
    %185 = vmatpush1.msra.mxu0 0.0
    %186 = vmatprep.subr.mxu0 0.0
    %187 = vmatpush1.msra.mxu0 0.0
    %188 = vmatprep.subr.mxu0 0.0
    %189 = vmatpush1.msra.mxu0 0.0
    %190 = vmatprep.subr.mxu0 0.0
    %191 = vmatpush1.msra.mxu0 0.0
    %192 = vmatprep.subr.mxu0 0.0
    %193 = vmatpush1.msra.mxu0 0.0
    %194 = vmatprep.subr.mxu0 0.0
    %195 = vmatpush1.msra.mxu0 0.0
    %196 = vmatprep.subr.mxu0 0.0
    %197 = vmatpush1.msra.mxu0 0.0
    %198 = vmatprep.subr.mxu0 0.0
    %199 = vmatpush1.msra.mxu0 0.0
    %200 = vmatprep.subr.mxu0 0.0
    %201 = vmatpush1.msra.mxu0 0.0
    %202 = vmatprep.subr.mxu0 0.0
    %203 = vmatpush1.msra.mxu0 0.0
    %204 = vmatprep.mubr.f32.mxu0 0.0
    %205 = vmatmul.mubr.f32.gmra.mrb[0].mxu0 %v115
    %v206 = vpop.f32.mrb[0].mxu0
    %v207 = vadd.f32 %v138, %v206
    %v208 = vpop.f32.mrb[0].mxu0
    %209 = vmatprep.mubr.f32.mxu0 0.0
    %210 = vmatmul.mubr.f32.gmra.mrb[0].mxu0 %v116
    %v211 = vpop.f32.mrb[0].mxu0
    %v212 = vadd.f32 %v138, %v211
    %v213 = vpop.f32.mrb[0].mxu0
    %214 = vdwg.mxu0
    %v215 = vmul.f32 %v207, 0.5
    %v216 = vmul.f32 %v212, 0.5
    %v217 = vmul.f32 %v207, 0.70710677
    %v218 = vmul.f32 %v212, 0.70710677
    %v219 = verf.f32.pop %v217
    %v220 = verf.f32.pop %v218
    %v221 = vadd.f32 %v219, 1.0
    %v222 = vadd.f32 %v220, 1.0
    %v223 = vmul.f32 %v215, %v221
    %v224 = vmul.f32 %v216, %v222
    %v225 = vld [vmem:[#allocation7] sm:$0xff]
    %v226 = vld [vmem:[#allocation7 + $0x8] sm:$0xff]
    %v227 = vld [vmem:[#allocation7 + $0x10] sm:$0xff]
    %v228 = vld [vmem:[#allocation7 + $0x18] sm:$0xff]
    %v229 = vld [vmem:[#allocation7 + $0x20] sm:$0xff]
    %v230 = vld [vmem:[#allocation7 + $0x28] sm:$0xff]
    %v231 = vld [vmem:[#allocation7 + $0x30] sm:$0xff]
    %v232 = vld [vmem:[#allocation7 + $0x38] sm:$0xff]
    %v233 = vld [vmem:[#allocation7 + $0x40] sm:$0xff]
    %v234 = vld [vmem:[#allocation7 + $0x48] sm:$0xff]
    %v235 = vld [vmem:[#allocation7 + $0x50] sm:$0xff]
    %v236 = vld [vmem:[#allocation7 + $0x58] sm:$0xff]
    %v237 = vld [vmem:[#allocation7 + $0x60] sm:$0xff]
    %v238 = vld [vmem:[#allocation7 + $0x68] sm:$0xff]
    %v239 = vld [vmem:[#allocation7 + $0x70] sm:$0xff]
    %v240 = vld [vmem:[#allocation7 + $0x78] sm:$0xff]
    %v241 = vld [vmem:[%s6] sm:$0x1]
    %v243 = vlaneseq
    %v244 = vshrl.u32 %v243, 7
    %v245 = vsub.s32 0, %v244
    %v246 = vrot.slane %v241, %v245
    %248 = vmatprep.subr.mxu0 0.0
    %249 = vmatpush1.msra.mxu0 %v225
    %250 = vmatprep.subr.mxu0 0.0
    %251 = vmatpush1.msra.mxu0 %v226
    %252 = vmatprep.subr.mxu0 0.0
    %253 = vmatpush1.msra.mxu0 %v227
    %254 = vmatprep.subr.mxu0 0.0
    %255 = vmatpush1.msra.mxu0 %v228
    %256 = vmatprep.subr.mxu0 0.0
    %257 = vmatpush1.msra.mxu0 %v229
    %258 = vmatprep.subr.mxu0 0.0
    %259 = vmatpush1.msra.mxu0 %v230
    %260 = vmatprep.subr.mxu0 0.0
    %261 = vmatpush1.msra.mxu0 %v231
    %262 = vmatprep.subr.mxu0 0.0
    %263 = vmatpush1.msra.mxu0 %v232
    %264 = vmatprep.subr.mxu0 0.0
    %265 = vmatpush1.msra.mxu0 %v233
    %266 = vmatprep.subr.mxu0 0.0
    %267 = vmatpush1.msra.mxu0 %v234
    %268 = vmatprep.subr.mxu0 0.0
    %269 = vmatpush1.msra.mxu0 %v235
    %270 = vmatprep.subr.mxu0 0.0
    %271 = vmatpush1.msra.mxu0 %v236
    %272 = vmatprep.subr.mxu0 0.0
    %273 = vmatpush1.msra.mxu0 %v237
    %274 = vmatprep.subr.mxu0 0.0
    %275 = vmatpush1.msra.mxu0 %v238
    %276 = vmatprep.subr.mxu0 0.0
    %277 = vmatpush1.msra.mxu0 %v239
    %278 = vmatprep.subr.mxu0 0.0
    %279 = vmatpush1.msra.mxu0 %v240
    %280 = vmatprep.subr.mxu0 0.0
    %281 = vmatpush1.msra.mxu0 0.0
    %282 = vmatprep.subr.mxu0 0.0
    %283 = vmatpush1.msra.mxu0 0.0
    %284 = vmatprep.subr.mxu0 0.0
    %285 = vmatpush1.msra.mxu0 0.0
    %286 = vmatprep.subr.mxu0 0.0
    %287 = vmatpush1.msra.mxu0 0.0
    %288 = vmatprep.subr.mxu0 0.0
    %289 = vmatpush1.msra.mxu0 0.0
    %290 = vmatprep.subr.mxu0 0.0
    %291 = vmatpush1.msra.mxu0 0.0
    %292 = vmatprep.subr.mxu0 0.0
    %293 = vmatpush1.msra.mxu0 0.0
    %294 = vmatprep.subr.mxu0 0.0
    %295 = vmatpush1.msra.mxu0 0.0
    %296 = vmatprep.subr.mxu0 0.0
    %297 = vmatpush1.msra.mxu0 0.0
    %298 = vmatprep.subr.mxu0 0.0
    %299 = vmatpush1.msra.mxu0 0.0
    %300 = vmatprep.subr.mxu0 0.0
    %301 = vmatpush1.msra.mxu0 0.0
    %302 = vmatprep.subr.mxu0 0.0
    %303 = vmatpush1.msra.mxu0 0.0
    %304 = vmatprep.subr.mxu0 0.0
    %305 = vmatpush1.msra.mxu0 0.0
    %306 = vmatprep.subr.mxu0 0.0
    %307 = vmatpush1.msra.mxu0 0.0
    %308 = vmatprep.subr.mxu0 0.0
    %309 = vmatpush1.msra.mxu0 0.0
    %310 = vmatprep.subr.mxu0 0.0
    %311 = vmatpush1.msra.mxu0 0.0
    %312 = vmatprep.mubr.f32.mxu0 0.0
    %313 = vmatmul.mubr.f32.gmra.mrb[0].mxu0 %v223
    %v314 = vpop.f32.mrb[0].mxu0
    %v315 = vadd.f32 %v246, %v314
    %v316 = vpop.f32.mrb[0].mxu0
    %317 = vmatprep.mubr.f32.mxu0 0.0
    %318 = vmatmul.mubr.f32.gmra.mrb[0].mxu0 %v224
    %v319 = vpop.f32.mrb[0].mxu0
    %v320 = vadd.f32 %v246, %v319
    %v321 = vpop.f32.mrb[0].mxu0
    %322 = vdwg.mxu0
    %v323 = vadd.f32 %v115, %v315
    %v324 = vadd.f32 %v116, %v320
    %325 = vst [vmem:[#allocation8] sm:$0xff] %v323
    %326 = vst [vmem:[#allocation8 + $0x8] sm:$0xff] %v324
    // Predicated region
    $region42: #{tpu_custom_call.1} parent=1 // pred_check
      _
    $region43: #{tpu_custom_call.1} parent=1 // pred_check_branch
      %328 = sbr.rel (0) target = $region45
    $region44: #{tpu_custom_call.1} parent=1 // pred_region
      %s330 = ssub.s32 256, 256
      %331 = vsyncadd [#allocation4], %s330
      %s332 = sshll.u32 [#allocation8], 4
      %s333 = int_to_ptr.vmem [resolvable:$true] %s332
      %338 = dma.vmem_to_hbm [thread:$0]  %s333, 256, %s7, [#allocation4], 128, 128, 8
    $region45: #{tpu_custom_call.1} parent=1 // pred_fallthru
      _
    // Predicated region
    $region46: #{tpu_custom_call.1} parent=1 // pred_check
      _
    $region47: #{tpu_custom_call.1} parent=1 // pred_check_branch
      %340 = sbr.rel (0) target = $region49
    $region48: #{tpu_custom_call.1} parent=1 // pred_region
      %341 = dma.done [#allocation4], 256
    $region49: #{tpu_custom_call.1} parent=1 // pred_fallthru
      _
    %342 = vsyncpa [#allocation3], 1
    %343 = vsyncpa [#allocation6], 1
    %344 = vsyncpa [#allocation4], 1

// kernel: tpu_custom_call.1
$region0: #{tpu_custom_call.1}
  #allocation0 [shape = 'u32[]', space=smem, size = 0x4, offset = 0x4, fixed_abs, tag = 'smem constant byte address 0x4 - core index']
  #allocation1 [shape = 'u32[144,128]{1,0:T(1,128)}', space=vmem, size = 0x12000, scoped, tag = 'internal scratch']
  %s0 = inlined_call_operand.hbm [shape: f32[16,128], index: 0, kind: input, shape index: {}]
  %s1 = inlined_call_operand.vmem [shape: f32[1,128], index: 1, kind: input, shape index: {}]
  %s2 = inlined_call_operand.vmem [shape: f32[1,128], index: 2, kind: input, shape index: {}]
  %s3 = inlined_call_operand.hbm [shape: f32[128,128], index: 3, kind: input, shape index: {}]
  %s4 = inlined_call_operand.vmem [shape: f32[1,128], index: 4, kind: input, shape index: {}]
  %s5 = inlined_call_operand.hbm [shape: f32[128,128], index: 5, kind: input, shape index: {}]
  %s6 = inlined_call_operand.vmem [shape: f32[1,128], index: 6, kind: input, shape index: {}]
  %s7 = inlined_call_operand.hbm [shape: f32[16,128], index: 7, kind: output, shape index: {}]
  %s8 = sld [smem:[#allocation0]]
  $region50: #{tpu_custom_call.1} parent=0
    _
  %s10 = ssub.s32 1, %s8
  %s11 = scalar_select 0, %s10, %s8
  $region1: #{tpu_custom_call.1} parent=0
    #allocation2 [shape = 'u8[8192]{0}', space=vmem, size = 0x2000, scoped, tag = 'input window, operand 0, single buffered']
    #allocation3 [shape = 's32[1]{0}', space=sflag, size = 0x4, scoped, tag = 'scoped memory for tpu_custom_call.1']
    #allocation4 [shape = 's32[1]{0}', space=sflag, size = 0x4, scoped, tag = 'scoped memory for tpu_custom_call.1']
    #allocation5 [shape = 'u8[65536]{0}', space=vmem, size = 0x10000, scoped, tag = 'input window, operand 3, single buffered']
    #allocation6 [shape = 's32[1]{0}', space=sflag, size = 0x4, scoped, tag = 'scoped memory for tpu_custom_call.1']
    #allocation7 [shape = 'u8[65536]{0}', space=vmem, size = 0x10000, scoped, tag = 'input window, operand 5, single buffered']
    #allocation8 [shape = 'u8[8192]{0}', space=vmem, size = 0x2000, scoped, tag = 'output window, operand 0, single buffered']
    %12 = vsyncpa [#allocation3], 0
    %13 = vsyncpa [#allocation6], 0
    %14 = vsyncpa [#allocation4], 0
    // Predicated region
    $region2: #{tpu_custom_call.1} parent=1 // pred_check
      _
    $region3: #{tpu_custom_call.1} parent=1 // pred_check_branch
      %16 = sbr.rel (0) target = $region5
    $region4: #{tpu_custom_call.1} parent=1 // pred_region
      %s18 = ssub.s32 256, 256
      %19 = vsyncadd [#allocation3], %s18
      %s20 = sshll.u32 [#allocation2], 4
      %s21 = int_to_ptr.vmem [resolvable:$true] %s20
      %26 = dma.hbm_to_vmem [thread:$0]  %s0, 256, %s21, [#allocation3], 128, 128, 8
    $region5: #{tpu_custom_call.1} parent=1 // pred_fallthru
      _
    // Predicated region
    $region6: #{tpu_custom_call.1} parent=1 // pred_check
      _
    $region7: #{tpu_custom_call.1} parent=1 // pred_check_branch
      %28 = sbr.rel (0) target = $region9
    $region8: #{tpu_custom_call.1} parent=1 // pred_region
      _
    $region9: #{tpu_custom_call.1} parent=1 // pred_fallthru
      _
    // Predicated region
    $region10: #{tpu_custom_call.1} parent=1 // pred_check
      _
    $region11: #{tpu_custom_call.1} parent=1 // pred_check_branch
      %30 = sbr.rel (0) target = $region13
    $region12: #{tpu_custom_call.1} parent=1 // pred_region
      _
    $region13: #{tpu_custom_call.1} parent=1 // pred_fallthru
      _
    // Predicated region
    $region14: #{tpu_custom_call.1} parent=1 // pred_check
      _
    $region15: #{tpu_custom_call.1} parent=1 // pred_check_branch
      %32 = sbr.rel (0) target = $region17
    $region16: #{tpu_custom_call.1} parent=1 // pred_region
      %s34 = ssub.s32 2048, 2048
      %35 = vsyncadd [#allocation6], %s34
      %s36 = sshll.u32 [#allocation5], 4
      %s37 = int_to_ptr.vmem [resolvable:$true] %s36
      %42 = dma.hbm_to_vmem [thread:$0]  %s3, 2048, %s37, [#allocation6], 128, 128, 8
    $region17: #{tpu_custom_call.1} parent=1 // pred_fallthru
      _
    // Predicated region
    $region18: #{tpu_custom_call.1} parent=1 // pred_check
      _
    $region19: #{tpu_custom_call.1} parent=1 // pred_check_branch
      %44 = sbr.rel (0) target = $region21
    $region20: #{tpu_custom_call.1} parent=1 // pred_region
      _
    $region21: #{tpu_custom_call.1} parent=1 // pred_fallthru
      _
    // Predicated region
    $region22: #{tpu_custom_call.1} parent=1 // pred_check
      _
    $region23: #{tpu_custom_call.1} parent=1 // pred_check_branch
      %46 = sbr.rel (0) target = $region25
    $region24: #{tpu_custom_call.1} parent=1 // pred_region
      %s48 = ssub.s32 2048, 2048
      %49 = vsyncadd [#allocation6], %s48
      %s50 = sshll.u32 [#allocation7], 4
      %s51 = int_to_ptr.vmem [resolvable:$true] %s50
      %56 = dma.hbm_to_vmem [thread:$0]  %s5, 2048, %s51, [#allocation6], 128, 128, 8
    $region25: #{tpu_custom_call.1} parent=1 // pred_fallthru
      _
    // Predicated region
    $region26: #{tpu_custom_call.1} parent=1 // pred_check
      _
    $region27: #{tpu_custom_call.1} parent=1 // pred_check_branch
      %58 = sbr.rel (0) target = $region29
    $region28: #{tpu_custom_call.1} parent=1 // pred_region
      _
    $region29: #{tpu_custom_call.1} parent=1 // pred_fallthru
      _
    // Predicated region
    $region30: #{tpu_custom_call.1} parent=1 // pred_check
      _
    $region31: #{tpu_custom_call.1} parent=1 // pred_check_branch
      %60 = sbr.rel (0) target = $region33
    $region32: #{tpu_custom_call.1} parent=1 // pred_region
      %61 = dma.done [#allocation3], 256
    $region33: #{tpu_custom_call.1} parent=1 // pred_fallthru
      _
    // Predicated region
    $region34: #{tpu_custom_call.1} parent=1 // pred_check
      _
    $region35: #{tpu_custom_call.1} parent=1 // pred_check_branch
      %63 = sbr.rel (0) target = $region37
    $region36: #{tpu_custom_call.1} parent=1 // pred_region
      %64 = dma.done [#allocation6], 2048
    $region37: #{tpu_custom_call.1} parent=1 // pred_fallthru
      _
    // Predicated region
    $region38: #{tpu_custom_call.1} parent=1 // pred_check
      _
    $region39: #{tpu_custom_call.1} parent=1 // pred_check_branch
      %66 = sbr.rel (0) target = $region41
    $region40: #{tpu_custom_call.1} parent=1 // pred_region
      %67 = dma.done [#allocation6], 2048
    $region41: #{tpu_custom_call.1} parent=1 // pred_fallthru
      _
    %v68 = vld [vmem:[#allocation2] sm:$0xff]
    %v69 = vld [vmem:[#allocation2 + $0x8] sm:$0xff]
    %70 = vadd.xlane.f32.xlu0 %v68
    %v71 = vpop.xlane.xlu0 %70
    %72 = vadd.xlane.f32.xlu0 %v69
    %v73 = vpop.xlane.xlu0 %72
    %v74 = vmul.f32 %v71, 0.03125
    %v75 = vmul.f32 %v73, 0.03125
    %v76 = vsub.f32 %v68, %v74
    %v77 = vsub.f32 %v69, %v75
    %v78 = vlaneseq
    %v79 = vand.u32 %v78, 127
    %vm80 = vcmp.lt.s32.totalorder %v79, 32
    %v81 = vsel %vm80, 1, 0
    %vm82 = vcmp.eq.s32.totalorder %v81, 1
    %v83 = vsel %vm82, %v76, 0.0
    %v84 = vsel %vm82, %v77, 0.0
    %v85 = vmul.f32 %v83, %v83
    %v86 = vmul.f32 %v84, %v84
    %87 = vadd.xlane.f32.xlu0 %v85
    %v88 = vpop.xlane.xlu0 %87
    %89 = vadd.xlane.f32.xlu0 %v86
    %v90 = vpop.xlane.xlu0 %89
    %v91 = vmul.f32 %v88, 0.03125
    %v92 = vmul.f32 %v90, 0.03125
    %v93 = vadd.f32 %v91, 1e-05
    %v94 = vadd.f32 %v92, 1e-05
    %v95 = vrsqrt.pop %v93
    %v96 = vrsqrt.pop %v94
    %v97 = vmul.f32 %v76, %v95
    %v98 = vmul.f32 %v77, %v96
    %v99 = vld [vmem:[%s1] sm:$0x1]
    %v101 = vlaneseq
    %v102 = vshrl.u32 %v101, 7
    %v103 = vsub.s32 0, %v102
    %v104 = vrot.slane %v99, %v103
    %v106 = vmul.f32 %v97, %v104
    %v107 = vmul.f32 %v98, %v104
    %v108 = vld [vmem:[%s2] sm:$0x1]
    %v110 = vlaneseq
    %v111 = vshrl.u32 %v110, 7
    %v112 = vsub.s32 0, %v111
    %v113 = vrot.slane %v108, %v112
    %v115 = vadd.f32 %v106, %v113
    %v116 = vadd.f32 %v107, %v113
    %v117 = vld [vmem:[#allocation5] sm:$0xff]
    %v118 = vld [vmem:[#allocation5 + $0x8] sm:$0xff]
    %v119 = vld [vmem:[#allocation5 + $0x10] sm:$0xff]
    %v120 = vld [vmem:[#allocation5 + $0x18] sm:$0xff]
    %v121 = vld [vmem:[#allocation5 + $0x20] sm:$0xff]
    %v122 = vld [vmem:[#allocation5 + $0x28] sm:$0xff]
    %v123 = vld [vmem:[#allocation5 + $0x30] sm:$0xff]
    %v124 = vld [vmem:[#allocation5 + $0x38] sm:$0xff]
    %v125 = vld [vmem:[#allocation5 + $0x40] sm:$0xff]
    %v126 = vld [vmem:[#allocation5 + $0x48] sm:$0xff]
    %v127 = vld [vmem:[#allocation5 + $0x50] sm:$0xff]
    %v128 = vld [vmem:[#allocation5 + $0x58] sm:$0xff]
    %v129 = vld [vmem:[#allocation5 + $0x60] sm:$0xff]
    %v130 = vld [vmem:[#allocation5 + $0x68] sm:$0xff]
    %v131 = vld [vmem:[#allocation5 + $0x70] sm:$0xff]
    %v132 = vld [vmem:[#allocation5 + $0x78] sm:$0xff]
    %v133 = vld [vmem:[%s4] sm:$0x1]
    %v135 = vlaneseq
    %v136 = vshrl.u32 %v135, 7
    %v137 = vsub.s32 0, %v136
    %v138 = vrot.slane %v133, %v137
    %140 = vmatprep.subr.mxu0 0.0
    %141 = vmatpush1.msra.mxu0 %v117
    %142 = vmatprep.subr.mxu0 0.0
    %143 = vmatpush1.msra.mxu0 %v118
    %144 = vmatprep.subr.mxu0 0.0
    %145 = vmatpush1.msra.mxu0 %v119
    %146 = vmatprep.subr.mxu0 0.0
    %147 = vmatpush1.msra.mxu0 %v120
    %148 = vmatprep.subr.mxu0 0.0
    %149 = vmatpush1.msra.mxu0 %v121
    %150 = vmatprep.subr.mxu0 0.0
    %151 = vmatpush1.msra.mxu0 %v122
    %152 = vmatprep.subr.mxu0 0.0
    %153 = vmatpush1.msra.mxu0 %v123
    %154 = vmatprep.subr.mxu0 0.0
    %155 = vmatpush1.msra.mxu0 %v124
    %156 = vmatprep.subr.mxu0 0.0
    %157 = vmatpush1.msra.mxu0 %v125
    %158 = vmatprep.subr.mxu0 0.0
    %159 = vmatpush1.msra.mxu0 %v126
    %160 = vmatprep.subr.mxu0 0.0
    %161 = vmatpush1.msra.mxu0 %v127
    %162 = vmatprep.subr.mxu0 0.0
    %163 = vmatpush1.msra.mxu0 %v128
    %164 = vmatprep.subr.mxu0 0.0
    %165 = vmatpush1.msra.mxu0 %v129
    %166 = vmatprep.subr.mxu0 0.0
    %167 = vmatpush1.msra.mxu0 %v130
    %168 = vmatprep.subr.mxu0 0.0
    %169 = vmatpush1.msra.mxu0 %v131
    %170 = vmatprep.subr.mxu0 0.0
    %171 = vmatpush1.msra.mxu0 %v132
    %172 = vmatprep.subr.mxu0 0.0
    %173 = vmatpush1.msra.mxu0 0.0
    %174 = vmatprep.subr.mxu0 0.0
    %175 = vmatpush1.msra.mxu0 0.0
    %176 = vmatprep.subr.mxu0 0.0
    %177 = vmatpush1.msra.mxu0 0.0
    %178 = vmatprep.subr.mxu0 0.0
    %179 = vmatpush1.msra.mxu0 0.0
    %180 = vmatprep.subr.mxu0 0.0
    %181 = vmatpush1.msra.mxu0 0.0
    %182 = vmatprep.subr.mxu0 0.0
    %183 = vmatpush1.msra.mxu0 0.0
    %184 = vmatprep.subr.mxu0 0.0
    %185 = vmatpush1.msra.mxu0 0.0
    %186 = vmatprep.subr.mxu0 0.0
    %187 = vmatpush1.msra.mxu0 0.0
    %188 = vmatprep.subr.mxu0 0.0
    %189 = vmatpush1.msra.mxu0 0.0
    %190 = vmatprep.subr.mxu0 0.0
    %191 = vmatpush1.msra.mxu0 0.0
    %192 = vmatprep.subr.mxu0 0.0
    %193 = vmatpush1.msra.mxu0 0.0
    %194 = vmatprep.subr.mxu0 0.0
    %195 = vmatpush1.msra.mxu0 0.0
    %196 = vmatprep.subr.mxu0 0.0
    %197 = vmatpush1.msra.mxu0 0.0
    %198 = vmatprep.subr.mxu0 0.0
    %199 = vmatpush1.msra.mxu0 0.0
    %200 = vmatprep.subr.mxu0 0.0
    %201 = vmatpush1.msra.mxu0 0.0
    %202 = vmatprep.subr.mxu0 0.0
    %203 = vmatpush1.msra.mxu0 0.0
    %204 = vmatprep.mubr.f32.mxu0 0.0
    %205 = vmatmul.mubr.f32.gmra.mrb[0].mxu0 %v115
    %v206 = vpop.f32.mrb[0].mxu0
    %v207 = vadd.f32 %v138, %v206
    %v208 = vpop.f32.mrb[0].mxu0
    %209 = vmatprep.mubr.f32.mxu0 0.0
    %210 = vmatmul.mubr.f32.gmra.mrb[0].mxu0 %v116
    %v211 = vpop.f32.mrb[0].mxu0
    %v212 = vadd.f32 %v138, %v211
    %v213 = vpop.f32.mrb[0].mxu0
    %214 = vdwg.mxu0
    %v215 = vmul.f32 %v207, 0.5
    %v216 = vmul.f32 %v212, 0.5
    %v217 = vmul.f32 %v207, 0.70710677
    %v218 = vmul.f32 %v212, 0.70710677
    %v219 = verf.f32.pop %v217
    %v220 = verf.f32.pop %v218
    %v221 = vadd.f32 %v219, 1.0
    %v222 = vadd.f32 %v220, 1.0
    %v223 = vmul.f32 %v215, %v221
    %v224 = vmul.f32 %v216, %v222
    %v225 = vld [vmem:[#allocation7] sm:$0xff]
    %v226 = vld [vmem:[#allocation7 + $0x8] sm:$0xff]
    %v227 = vld [vmem:[#allocation7 + $0x10] sm:$0xff]
    %v228 = vld [vmem:[#allocation7 + $0x18] sm:$0xff]
    %v229 = vld [vmem:[#allocation7 + $0x20] sm:$0xff]
    %v230 = vld [vmem:[#allocation7 + $0x28] sm:$0xff]
    %v231 = vld [vmem:[#allocation7 + $0x30] sm:$0xff]
    %v232 = vld [vmem:[#allocation7 + $0x38] sm:$0xff]
    %v233 = vld [vmem:[#allocation7 + $0x40] sm:$0xff]
    %v234 = vld [vmem:[#allocation7 + $0x48] sm:$0xff]
    %v235 = vld [vmem:[#allocation7 + $0x50] sm:$0xff]
    %v236 = vld [vmem:[#allocation7 + $0x58] sm:$0xff]
    %v237 = vld [vmem:[#allocation7 + $0x60] sm:$0xff]
    %v238 = vld [vmem:[#allocation7 + $0x68] sm:$0xff]
    %v239 = vld [vmem:[#allocation7 + $0x70] sm:$0xff]
    %v240 = vld [vmem:[#allocation7 + $0x78] sm:$0xff]
    %v241 = vld [vmem:[%s6] sm:$0x1]
    %v243 = vlaneseq
    %v244 = vshrl.u32 %v243, 7
    %v245 = vsub.s32 0, %v244
    %v246 = vrot.slane %v241, %v245
    %248 = vmatprep.subr.mxu0 0.0
    %249 = vmatpush1.msra.mxu0 %v225
    %250 = vmatprep.subr.mxu0 0.0
    %251 = vmatpush1.msra.mxu0 %v226
    %252 = vmatprep.subr.mxu0 0.0
    %253 = vmatpush1.msra.mxu0 %v227
    %254 = vmatprep.subr.mxu0 0.0
    %255 = vmatpush1.msra.mxu0 %v228
    %256 = vmatprep.subr.mxu0 0.0
    %257 = vmatpush1.msra.mxu0 %v229
    %258 = vmatprep.subr.mxu0 0.0
    %259 = vmatpush1.msra.mxu0 %v230
    %260 = vmatprep.subr.mxu0 0.0
    %261 = vmatpush1.msra.mxu0 %v231
    %262 = vmatprep.subr.mxu0 0.0
    %263 = vmatpush1.msra.mxu0 %v232
    %264 = vmatprep.subr.mxu0 0.0
    %265 = vmatpush1.msra.mxu0 %v233
    %266 = vmatprep.subr.mxu0 0.0
    %267 = vmatpush1.msra.mxu0 %v234
    %268 = vmatprep.subr.mxu0 0.0
    %269 = vmatpush1.msra.mxu0 %v235
    %270 = vmatprep.subr.mxu0 0.0
    %271 = vmatpush1.msra.mxu0 %v236
    %272 = vmatprep.subr.mxu0 0.0
    %273 = vmatpush1.msra.mxu0 %v237
    %274 = vmatprep.subr.mxu0 0.0
    %275 = vmatpush1.msra.mxu0 %v238
    %276 = vmatprep.subr.mxu0 0.0
    %277 = vmatpush1.msra.mxu0 %v239
    %278 = vmatprep.subr.mxu0 0.0
    %279 = vmatpush1.msra.mxu0 %v240
    %280 = vmatprep.subr.mxu0 0.0
    %281 = vmatpush1.msra.mxu0 0.0
    %282 = vmatprep.subr.mxu0 0.0
    %283 = vmatpush1.msra.mxu0 0.0
    %284 = vmatprep.subr.mxu0 0.0
    %285 = vmatpush1.msra.mxu0 0.0
    %286 = vmatprep.subr.mxu0 0.0
    %287 = vmatpush1.msra.mxu0 0.0
    %288 = vmatprep.subr.mxu0 0.0
    %289 = vmatpush1.msra.mxu0 0.0
    %290 = vmatprep.subr.mxu0 0.0
    %291 = vmatpush1.msra.mxu0 0.0
    %292 = vmatprep.subr.mxu0 0.0
    %293 = vmatpush1.msra.mxu0 0.0
    %294 = vmatprep.subr.mxu0 0.0
    %295 = vmatpush1.msra.mxu0 0.0
    %296 = vmatprep.subr.mxu0 0.0
    %297 = vmatpush1.msra.mxu0 0.0
    %298 = vmatprep.subr.mxu0 0.0
    %299 = vmatpush1.msra.mxu0 0.0
    %300 = vmatprep.subr.mxu0 0.0
    %301 = vmatpush1.msra.mxu0 0.0
    %302 = vmatprep.subr.mxu0 0.0
    %303 = vmatpush1.msra.mxu0 0.0
    %304 = vmatprep.subr.mxu0 0.0
    %305 = vmatpush1.msra.mxu0 0.0
    %306 = vmatprep.subr.mxu0 0.0
    %307 = vmatpush1.msra.mxu0 0.0
    %308 = vmatprep.subr.mxu0 0.0
    %309 = vmatpush1.msra.mxu0 0.0
    %310 = vmatprep.subr.mxu0 0.0
    %311 = vmatpush1.msra.mxu0 0.0
    %312 = vmatprep.mubr.f32.mxu0 0.0
    %313 = vmatmul.mubr.f32.gmra.mrb[0].mxu0 %v223
    %v314 = vpop.f32.mrb[0].mxu0
    %v315 = vadd.f32 %v246, %v314
    %v316 = vpop.f32.mrb[0].mxu0
    %317 = vmatprep.mubr.f32.mxu0 0.0
    %318 = vmatmul.mubr.f32.gmra.mrb[0].mxu0 %v224
    %v319 = vpop.f32.mrb[0].mxu0
    %v320 = vadd.f32 %v246, %v319
    %v321 = vpop.f32.mrb[0].mxu0
    %322 = vdwg.mxu0
    %v323 = vadd.f32 %v115, %v315
    %v324 = vadd.f32 %v116, %v320
    %325 = vst [vmem:[#allocation8] sm:$0xff] %v323
    %326 = vst [vmem:[#allocation8 + $0x8] sm:$0xff] %v324
    // Predicated region
    $region42: #{tpu_custom_call.1} parent=1 // pred_check
      _
    $region43: #{tpu_custom_call.1} parent=1 // pred_check_branch
      %328 = sbr.rel (0) target = $region45
    $region44: #{tpu_custom_call.1} parent=1 // pred_region
      %s330 = ssub.s32 256, 256
      %331 = vsyncadd [#allocation4], %s330
      %s332 = sshll.u32 [#allocation8], 4
      %s333 = int_to_ptr.vmem [resolvable:$true] %s332
      %338 = dma.vmem_to_hbm [thread:$0]  %s333, 256, %s7, [#allocation4], 128, 128, 8
    $region45: #{tpu_custom_call.1} parent=1 // pred_fallthru
      _
    // Predicated region
    $region46: #{tpu_custom_call.1} parent=1 // pred_check
      _
    $region47: #{tpu_custom_call.1} parent=1 // pred_check_branch
      %340 = sbr.rel (0) target = $region49
    $region48: #{tpu_custom_call.1} parent=1 // pred_region
      %341 = dma.done [#allocation4], 256
    $region49: #{tpu_custom_call.1} parent=1 // pred_fallthru
      _
    %342 = vsyncpa [#allocation3], 1
    %343 = vsyncpa [#allocation6], 1
    %344 = vsyncpa [#allocation4], 1

</llo_original>
